<compile_context>
chip_gen: v5e
topology: v5e:2x2
jax: 0.10.0
libtpu: 0.0.40
codegen_flags: <defaults>
</compile_context>

<pallas_src>
import jax
import jax.numpy as jnp
from jax.experimental import pallas as pl
from jax.experimental.pallas import tpu as pltpu


def _mlp_kernel(x_ref, w1_ref, b1_ref, w2_ref, b2_ref, w3_ref, b3_ref, o_ref):
    xt = x_ref[...]                                    # (2, BT) f32, batch on lanes
    w1 = w1_ref[...]                                   # (64, 2) f32 (PyTorch (out, in))

    # Layer 1: contraction length 2 -> VPU FMA (no MXU push/pop for K=2).
    h1 = (w1[:, 0:1] * xt[0:1, :]
          + w1[:, 1:2] * xt[1:2, :]
          + b1_ref[...])                               # (64, BT) f32
    h1 = jnp.maximum(h1, 0.0)                          # ReLU

    # Dropout(0.1): identity in eval mode.

    # Layer 2: the only real MXU matmul, (64,64) @ (64,BT) -> all BT result lanes used.
    h2 = jnp.dot(w2_ref[...], h1,
                 preferred_element_type=jnp.float32) + b2_ref[...]   # (64, BT)
    h2 = jnp.maximum(h2, 0.0)                          # ReLU

    # Layer 3: single output feature -> VPU multiply + sublane reduce, lane-dense result.
    out = jnp.sum(h2 * w3_ref[...], axis=0, keepdims=True) + b3_ref[0, 0]   # (1, BT)
    o_ref[...] = out.astype(o_ref.dtype)


def _round_up(n, m):
    return ((n + m - 1) // m) * m


def _choose_tiles(B, block_batch):
    """Lane-granular (128) batch tile with bounded padding and >=2 grid steps
    (even count) whenever there is more than one lane group of work (v7x megacore)."""
    LANE = 128
    block_batch = max(block_batch, LANE)
    Bl = _round_up(max(B, 1), LANE)
    n = max(pl.cdiv(Bl, block_batch), 1)
    if Bl // LANE >= 2:
        n = max(n, 2)
        if n % 2:
            n += 1                      # even step count -> balanced split across 2 TCs
    BT = _round_up(pl.cdiv(Bl, n), LANE)
    Bp = BT * n
    return BT, Bp


def electronics_cooling_forward(x, params, *, block_batch=2048):
    """x: (B, 2) float32.
    params (all float32, PyTorch-style layouts):
      w1 (64, 2)  = fc1.weight,   b1 (64, 1) = fc1.bias column
      w2 (64, 64) = fc2.weight,   b2 (64, 1) = fc2.bias column
      w3 (64, 1)  = output.weight transposed to a column, b3 (1, 1) = output.bias
    """
    B = x.shape[0]
    w1, b1, w2, b2, w3, b3 = (params[k] for k in ("w1", "b1", "w2", "b2", "w3", "b3"))

    BT, Bp = _choose_tiles(B, block_batch)

    # Batch-in-lanes layout: (2, Bp).  The transpose/pad is a tiny one-off XLA op.
    xt = x.T
    if Bp != B:
        xt = jnp.pad(xt, ((0, 0), (0, Bp - B)))
    grid = (Bp // BT,)

    # Weights/biases: constant block index -> resident in VMEM, no re-DMA across steps.
    resident = lambda a: pl.BlockSpec(a.shape, lambda i: (0, 0))

    out_t = pl.pallas_call(
        _mlp_kernel,
        out_shape=jax.ShapeDtypeStruct((1, Bp), jnp.float32),
        grid=grid,
        in_specs=[
            pl.BlockSpec((2, BT), lambda i: (0, i)),      # x streams by lane tile
            resident(w1), resident(b1),
            resident(w2), resident(b2),
            resident(w3),
            pl.BlockSpec(memory_space=pltpu.SMEM),        # b3: scalar in SMEM
        ],
        out_specs=pl.BlockSpec((1, BT), lambda i: (0, i)),  # lane-dense output block
        compiler_params=pltpu.CompilerParams(
            dimension_semantics=("parallel",),              # megacore sharding on v7x
        ),
    )(xt, w1, b1, w2, b2, w3, b3)

    # (1, Bp) -> (B, 1): slice off padding; reshape is free.
    return out_t[0, :B].reshape(B, 1)


def init_params(key):
    """Deterministic PyTorch-style init: U(-1/sqrt(fan_in), 1/sqrt(fan_in)),
    stored in the layouts the transposed kernel consumes directly."""
    ks = jax.random.split(key, 6)

    def lin(kw, kb, fan_in, fan_out):
        bound = 1.0 / jnp.sqrt(jnp.float32(fan_in))
        w = jax.random.uniform(kw, (fan_out, fan_in), jnp.float32, -bound, bound)
        b = jax.random.uniform(kb, (fan_out, 1), jnp.float32, -bound, bound)
        return w, b

    w1, b1 = lin(ks[0], ks[1], 2, 64)      # (64, 2), (64, 1)
    w2, b2 = lin(ks[2], ks[3], 64, 64)     # (64, 64), (64, 1)
    w3_oi, b3 = lin(ks[4], ks[5], 64, 1)   # (1, 64), (1, 1)
    w3 = w3_oi.T                           # (64, 1) column for the VPU reduce
    return dict(w1=w1, b1=b1, w2=w2, b2=b2, w3=w3, b3=b3)


if __name__ == "__main__":
    key = jax.random.PRNGKey(0)
    kx, kp = jax.random.split(key)
    B = 8
    x = jax.random.normal(kx, (B, 2), jnp.float32)   # (batch, 2) features (power, airflow)
    params = init_params(kp)

    out = jax.block_until_ready(electronics_cooling_forward(x, params))

    # Pure-JAX f32 reference (eval-mode dropout = identity).
    hp = jax.lax.Precision.HIGHEST
    ref_h1 = jnp.maximum(jnp.dot(x, params["w1"].T, precision=hp) + params["b1"][:, 0], 0.0)
    ref_h2 = jnp.maximum(jnp.dot(ref_h1, params["w2"].T, precision=hp) + params["b2"][:, 0], 0.0)
    ref = jnp.dot(ref_h2, params["w3"], precision=hp) + params["b3"][0, 0]

    assert out.shape == (B, 1)
    assert jnp.allclose(out, ref, atol=2e-3, rtol=2e-3), (
        f"max abs diff {jnp.max(jnp.abs(out - ref))}")

    print("KERNEL_OK")
</pallas_src>

<mosaic_0001>
module attributes {stable_mosaic.version = 11 : i64} {
  func.func @_mlp_kernel(%arg0: i32, %arg1: memref<2x128xf32, #tpu.memory_space<vmem>>, %arg2: memref<64x2xf32, #tpu.memory_space<vmem>>, %arg3: memref<64x1xf32, #tpu.memory_space<vmem>>, %arg4: memref<64x64xf32, #tpu.memory_space<vmem>>, %arg5: memref<64x1xf32, #tpu.memory_space<vmem>>, %arg6: memref<64x1xf32, #tpu.memory_space<vmem>>, %arg7: memref<1x1xf32, #tpu.memory_space<smem>>, %arg8: memref<1x128xf32, #tpu.memory_space<vmem>>) attributes {dimension_semantics = [#tpu.dimension_semantics<parallel>], iteration_bounds = array<i64: 1>, scalar_prefetch = 0 : i64, scratch_operands = 0 : i64, tpu.core_type = #tpu.core_type<tc>, window_params = [{transform_indices = @transform_0, window_bounds = array<i64: 2, 128>}, {pipeline_mode = #tpu.pipeline_mode<synchronous>, transform_indices = @transform_1, window_bounds = array<i64: 64, 2>}, {pipeline_mode = #tpu.pipeline_mode<synchronous>, transform_indices = @transform_2, window_bounds = array<i64: 64, 1>}, {pipeline_mode = #tpu.pipeline_mode<synchronous>, transform_indices = @transform_3, window_bounds = array<i64: 64, 64>}, {pipeline_mode = #tpu.pipeline_mode<synchronous>, transform_indices = @transform_4, window_bounds = array<i64: 64, 1>}, {pipeline_mode = #tpu.pipeline_mode<synchronous>, transform_indices = @transform_5, window_bounds = array<i64: 64, 1>}, {transform_indices = @transform_6, window_bounds = array<i64: 1, 1>}, {transform_indices = @transform_7, window_bounds = array<i64: 1, 128>}]} {
    %c0 = arith.constant 0 : index
    %c0_0 = arith.constant 0 : index
    %0 = vector.load %arg1[%c0, %c0_0] : memref<2x128xf32, #tpu.memory_space<vmem>>, vector<2x128xf32>
    %c0_1 = arith.constant 0 : index
    %c0_2 = arith.constant 0 : index
    %1 = vector.load %arg2[%c0_1, %c0_2] : memref<64x2xf32, #tpu.memory_space<vmem>>, vector<64x2xf32>
    %2 = vector.extract_strided_slice %1 {offsets = [0, 0], sizes = [64, 1], strides = [1, 1]} : vector<64x2xf32> to vector<64x1xf32>
    %3 = vector.extract_strided_slice %0 {offsets = [0, 0], sizes = [1, 128], strides = [1, 1]} : vector<2x128xf32> to vector<1x128xf32>
    %4 = vector.broadcast %2 : vector<64x1xf32> to vector<64x128xf32>
    %5 = vector.broadcast %3 : vector<1x128xf32> to vector<64x128xf32>
    %6 = arith.mulf %4, %5 : vector<64x128xf32>
    %7 = vector.extract_strided_slice %1 {offsets = [0, 1], sizes = [64, 1], strides = [1, 1]} : vector<64x2xf32> to vector<64x1xf32>
    %8 = vector.extract_strided_slice %0 {offsets = [1, 0], sizes = [1, 128], strides = [1, 1]} : vector<2x128xf32> to vector<1x128xf32>
    %9 = vector.broadcast %7 : vector<64x1xf32> to vector<64x128xf32>
    %10 = vector.broadcast %8 : vector<1x128xf32> to vector<64x128xf32>
    %11 = arith.mulf %9, %10 : vector<64x128xf32>
    %12 = arith.addf %6, %11 : vector<64x128xf32>
    %c0_3 = arith.constant 0 : index
    %c0_4 = arith.constant 0 : index
    %13 = vector.load %arg3[%c0_3, %c0_4] : memref<64x1xf32, #tpu.memory_space<vmem>>, vector<64x1xf32>
    %14 = vector.broadcast %13 : vector<64x1xf32> to vector<64x128xf32>
    %15 = arith.addf %12, %14 : vector<64x128xf32>
    %cst = arith.constant 0.000000e+00 : f32
    %16 = vector.broadcast %cst : f32 to vector<64x128xf32>
    %17 = arith.maximumf %15, %16 : vector<64x128xf32>
    %c0_5 = arith.constant 0 : index
    %c0_6 = arith.constant 0 : index
    %18 = vector.load %arg4[%c0_5, %c0_6] : memref<64x64xf32, #tpu.memory_space<vmem>>, vector<64x64xf32>
    %cst_7 = arith.constant dense<0.000000e+00> : vector<64x128xf32>
    %19 = tpu.matmul %18, %17, %cst_7 {dimension_numbers = #tpu.dot_dimension_numbers<[1], [0], [0], [1], [0, 0, 1, 1], [], []>} : vector<64x64xf32>, vector<64x128xf32>, vector<64x128xf32> -> vector<64x128xf32>
    %c0_8 = arith.constant 0 : index
    %c0_9 = arith.constant 0 : index
    %20 = vector.load %arg5[%c0_8, %c0_9] : memref<64x1xf32, #tpu.memory_space<vmem>>, vector<64x1xf32>
    %21 = vector.broadcast %20 : vector<64x1xf32> to vector<64x128xf32>
    %22 = arith.addf %19, %21 : vector<64x128xf32>
    %cst_10 = arith.constant 0.000000e+00 : f32
    %23 = vector.broadcast %cst_10 : f32 to vector<64x128xf32>
    %24 = arith.maximumf %22, %23 : vector<64x128xf32>
    %c0_11 = arith.constant 0 : index
    %c0_12 = arith.constant 0 : index
    %25 = vector.load %arg6[%c0_11, %c0_12] : memref<64x1xf32, #tpu.memory_space<vmem>>, vector<64x1xf32>
    %26 = vector.broadcast %25 : vector<64x1xf32> to vector<64x128xf32>
    %27 = arith.mulf %24, %26 : vector<64x128xf32>
    %cst_13 = arith.constant dense<0.000000e+00> : vector<128xf32>
    %28 = vector.multi_reduction <add>, %27, %cst_13 [0] : vector<64x128xf32> to vector<128xf32>
    %29 = vector.shape_cast %28 : vector<128xf32> to vector<1x128xf32>
    %c0_14 = arith.constant 0 : index
    %c0_15 = arith.constant 0 : index
    %30 = memref.load %arg7[%c0_14, %c0_15] : memref<1x1xf32, #tpu.memory_space<smem>>
    %31 = vector.broadcast %30 : f32 to vector<1x128xf32>
    %32 = arith.addf %29, %31 : vector<1x128xf32>
    %c0_16 = arith.constant 0 : index
    %c0_17 = arith.constant 0 : index
    %33 = vector.load %arg8[%c0_16, %c0_17] : memref<1x128xf32, #tpu.memory_space<vmem>>, vector<1x128xf32>
    tpu.vector_store %arg8[%c0_16, %c0_17], %32 {strides = array<i32>} : memref<1x128xf32, #tpu.memory_space<vmem>>, vector<1x128xf32>,
    return
  }
  func.func @transform_0(%arg0: i32) -> (i32, i32) {
    %c0_i32 = arith.constant 0 : i32
    %c0_i32_0 = arith.constant 0 : i32
    return %c0_i32, %arg0 : i32, i32
  }
  func.func @transform_1(%arg0: i32) -> (i32, i32) {
    %c0_i32 = arith.constant 0 : i32
    %c0_i32_0 = arith.constant 0 : i32
    %c0_i32_1 = arith.constant 0 : i32
    return %c0_i32, %c0_i32_0 : i32, i32
  }
  func.func @transform_2(%arg0: i32) -> (i32, i32) {
    %c0_i32 = arith.constant 0 : i32
    %c0_i32_0 = arith.constant 0 : i32
    %c0_i32_1 = arith.constant 0 : i32
    return %c0_i32, %c0_i32_0 : i32, i32
  }
  func.func @transform_3(%arg0: i32) -> (i32, i32) {
    %c0_i32 = arith.constant 0 : i32
    %c0_i32_0 = arith.constant 0 : i32
    %c0_i32_1 = arith.constant 0 : i32
    return %c0_i32, %c0_i32_0 : i32, i32
  }
  func.func @transform_4(%arg0: i32) -> (i32, i32) {
    %c0_i32 = arith.constant 0 : i32
    %c0_i32_0 = arith.constant 0 : i32
    %c0_i32_1 = arith.constant 0 : i32
    return %c0_i32, %c0_i32_0 : i32, i32
  }
  func.func @transform_5(%arg0: i32) -> (i32, i32) {
    %c0_i32 = arith.constant 0 : i32
    %c0_i32_0 = arith.constant 0 : i32
    %c0_i32_1 = arith.constant 0 : i32
    return %c0_i32, %c0_i32_0 : i32, i32
  }
  func.func @transform_6(%arg0: i32) -> (i32, i32) {
    %c0_i32 = arith.constant 0 : i32
    %c0_i32_0 = arith.constant 0 : i32
    %c0_i32_1 = arith.constant 0 : i32
    return %c0_i32, %c0_i32_0 : i32, i32
  }
  func.func @transform_7(%arg0: i32) -> (i32, i32) {
    %c0_i32 = arith.constant 0 : i32
    %c0_i32_0 = arith.constant 0 : i32
    return %c0_i32, %arg0 : i32, i32
  }
}

</mosaic_0001>

<llo_original>
// kernel: tpu_custom_call.1
$region0: #{tpu_custom_call.1}
  #allocation0 [shape = 'u32[]', space=smem, size = 0x4, offset = 0x4, fixed_abs, tag = 'smem constant byte address 0x4 - core index']
  #allocation1 [shape = 'u32[72,128]{1,0:T(1,128)}', space=vmem, size = 0x9000, scoped, tag = 'internal scratch']
  #allocation2 [shape = 'f32[1,1]{1,0:T(1,128)S(6)}', space=smem, size = 0x200, scoped, tag = 'scoped memory for tpu_custom_call.1']
  %s0 = inlined_call_operand.vmem [shape: f32[2,128], index: 0, kind: input, shape index: {}]
  %s1 = inlined_call_operand.vmem [shape: f32[64,2], index: 1, kind: input, shape index: {}]
  %s2 = inlined_call_operand.vmem [shape: f32[64,1], index: 2, kind: input, shape index: {}]
  %s3 = inlined_call_operand.vmem [shape: f32[64,64], index: 3, kind: input, shape index: {}]
  %s4 = inlined_call_operand.vmem [shape: f32[64,1], index: 4, kind: input, shape index: {}]
  %s5 = inlined_call_operand.vmem [shape: f32[64,1], index: 5, kind: input, shape index: {}]
  %s6 = inlined_call_operand.<no memory space> [shape: f32[1,1], index: 6, kind: input, shape index: {}]
  %s7 = inlined_call_operand.hbm [shape: f32[1,128], index: 7, kind: output, shape index: {}]
  %s8 = sld [smem:[#allocation0]]
  $region38: #{tpu_custom_call.1} parent=0
    _
  %s10 = ssub.s32 1, %s8
  %s11 = scalar_select 0, %s10, %s8
  %12 = sst [smem:[#allocation2]] %s6
  $region1: #{tpu_custom_call.1} parent=0
    #allocation3 [shape = 'u8[512]{0}', space=vmem, size = 0x400, scoped, tag = 'output window, operand 0, single buffered']
    #allocation4 [shape = 's32[1]{0}', space=sflag, size = 0x4, scoped, tag = 'scoped memory for tpu_custom_call.1']
    %13 = vsyncpa [#allocation4], 0
    // Predicated region
    $region2: #{tpu_custom_call.1} parent=1 // pred_check
      _
    $region3: #{tpu_custom_call.1} parent=1 // pred_check_branch
      %15 = sbr.rel (0) target = $region5
    $region4: #{tpu_custom_call.1} parent=1 // pred_region
      _
    $region5: #{tpu_custom_call.1} parent=1 // pred_fallthru
      _
    // Predicated region
    $region6: #{tpu_custom_call.1} parent=1 // pred_check
      _
    $region7: #{tpu_custom_call.1} parent=1 // pred_check_branch
      %17 = sbr.rel (0) target = $region9
    $region8: #{tpu_custom_call.1} parent=1 // pred_region
      _
    $region9: #{tpu_custom_call.1} parent=1 // pred_fallthru
      _
    // Predicated region
    $region10: #{tpu_custom_call.1} parent=1 // pred_check
      _
    $region11: #{tpu_custom_call.1} parent=1 // pred_check_branch
      %19 = sbr.rel (0) target = $region13
    $region12: #{tpu_custom_call.1} parent=1 // pred_region
      _
    $region13: #{tpu_custom_call.1} parent=1 // pred_fallthru
      _
    // Predicated region
    $region14: #{tpu_custom_call.1} parent=1 // pred_check
      _
    $region15: #{tpu_custom_call.1} parent=1 // pred_check_branch
      %21 = sbr.rel (0) target = $region17
    $region16: #{tpu_custom_call.1} parent=1 // pred_region
      _
    $region17: #{tpu_custom_call.1} parent=1 // pred_fallthru
      _
    // Predicated region
    $region18: #{tpu_custom_call.1} parent=1 // pred_check
      _
    $region19: #{tpu_custom_call.1} parent=1 // pred_check_branch
      %23 = sbr.rel (0) target = $region21
    $region20: #{tpu_custom_call.1} parent=1 // pred_region
      _
    $region21: #{tpu_custom_call.1} parent=1 // pred_fallthru
      _
    // Predicated region
    $region22: #{tpu_custom_call.1} parent=1 // pred_check
      _
    $region23: #{tpu_custom_call.1} parent=1 // pred_check_branch
      %25 = sbr.rel (0) target = $region25
    $region24: #{tpu_custom_call.1} parent=1 // pred_region
      _
    $region25: #{tpu_custom_call.1} parent=1 // pred_fallthru
      _
    // Predicated region
    $region26: #{tpu_custom_call.1} parent=1 // pred_check
      _
    $region27: #{tpu_custom_call.1} parent=1 // pred_check_branch
      %27 = sbr.rel (0) target = $region29
    $region28: #{tpu_custom_call.1} parent=1 // pred_region
      _
    $region29: #{tpu_custom_call.1} parent=1 // pred_fallthru
      _
    %v28 = vld [vmem:[%s0] sm:$0x3]
    %v29 = vld [vmem:[%s1] sm:$0xff]
    %v30 = vld [vmem:[%s1 + $0x8] sm:$0xff]
    %v31 = vld [vmem:[%s1 + $0x10] sm:$0xff]
    %v32 = vld [vmem:[%s1 + $0x18] sm:$0xff]
    %v33 = vld [vmem:[%s1 + $0x20] sm:$0xff]
    %v34 = vld [vmem:[%s1 + $0x28] sm:$0xff]
    %v35 = vld [vmem:[%s1 + $0x30] sm:$0xff]
    %v36 = vld [vmem:[%s1 + $0x38] sm:$0xff]
    %38 = vset.pattern.permute.xlu0 0
    %39 = vperm.xlu0 %38, %v29
    %v40 = vpop.permute.xlu0 %39
    %43 = vset.pattern.permute.xlu0 0
    %44 = vperm.xlu0 %43, %v30
    %v45 = vpop.permute.xlu0 %44
    %48 = vset.pattern.permute.xlu0 0
    %49 = vperm.xlu0 %48, %v31
    %v50 = vpop.permute.xlu0 %49
    %53 = vset.pattern.permute.xlu0 0
    %54 = vperm.xlu0 %53, %v32
    %v55 = vpop.permute.xlu0 %54
    %58 = vset.pattern.permute.xlu0 0
    %59 = vperm.xlu0 %58, %v33
    %v60 = vpop.permute.xlu0 %59
    %63 = vset.pattern.permute.xlu0 0
    %64 = vperm.xlu0 %63, %v34
    %v65 = vpop.permute.xlu0 %64
    %68 = vset.pattern.permute.xlu0 0
    %69 = vperm.xlu0 %68, %v35
    %v70 = vpop.permute.xlu0 %69
    %73 = vset.pattern.permute.xlu0 0
    %74 = vperm.xlu0 %73, %v36
    %v75 = vpop.permute.xlu0 %74
    %v77 = vperm.slane %v28, 0
    %v78 = vmul.f32 %v40, %v77
    %v79 = vmul.f32 %v45, %v77
    %v80 = vmul.f32 %v50, %v77
    %v81 = vmul.f32 %v55, %v77
    %v82 = vmul.f32 %v60, %v77
    %v83 = vmul.f32 %v65, %v77
    %v84 = vmul.f32 %v70, %v77
    %v85 = vmul.f32 %v75, %v77
    %86 = vset.pattern.permute.xlu0 1
    %87 = vperm.xlu0 %86, %v29
    %v88 = vpop.permute.xlu0 %87
    %90 = vset.pattern.permute.xlu0 1
    %91 = vperm.xlu0 %90, %v30
    %v92 = vpop.permute.xlu0 %91
    %94 = vset.pattern.permute.xlu0 1
    %95 = vperm.xlu0 %94, %v31
    %v96 = vpop.permute.xlu0 %95
    %98 = vset.pattern.permute.xlu0 1
    %99 = vperm.xlu0 %98, %v32
    %v100 = vpop.permute.xlu0 %99
    %102 = vset.pattern.permute.xlu0 1
    %103 = vperm.xlu0 %102, %v33
    %v104 = vpop.permute.xlu0 %103
    %106 = vset.pattern.permute.xlu0 1
    %107 = vperm.xlu0 %106, %v34
    %v108 = vpop.permute.xlu0 %107
    %110 = vset.pattern.permute.xlu0 1
    %111 = vperm.xlu0 %110, %v35
    %v112 = vpop.permute.xlu0 %111
    %114 = vset.pattern.permute.xlu0 1
    %115 = vperm.xlu0 %114, %v36
    %v116 = vpop.permute.xlu0 %115
    %v118 = vperm.slane %v28, 1
    %v119 = vmul.f32 %v88, %v118
    %v120 = vmul.f32 %v92, %v118
    %v121 = vmul.f32 %v96, %v118
    %v122 = vmul.f32 %v100, %v118
    %v123 = vmul.f32 %v104, %v118
    %v124 = vmul.f32 %v108, %v118
    %v125 = vmul.f32 %v112, %v118
    %v126 = vmul.f32 %v116, %v118
    %v127 = vadd.f32 %v78, %v119
    %v128 = vadd.f32 %v79, %v120
    %v129 = vadd.f32 %v80, %v121
    %v130 = vadd.f32 %v81, %v122
    %v131 = vadd.f32 %v82, %v123
    %v132 = vadd.f32 %v83, %v124
    %v133 = vadd.f32 %v84, %v125
    %v134 = vadd.f32 %v85, %v126
    %v135 = vld [vmem:[%s2] sm:$0xff]
    %v136 = vld [vmem:[%s2 + $0x8] sm:$0xff]
    %v137 = vld [vmem:[%s2 + $0x10] sm:$0xff]
    %v138 = vld [vmem:[%s2 + $0x18] sm:$0xff]
    %v139 = vld [vmem:[%s2 + $0x20] sm:$0xff]
    %v140 = vld [vmem:[%s2 + $0x28] sm:$0xff]
    %v141 = vld [vmem:[%s2 + $0x30] sm:$0xff]
    %v142 = vld [vmem:[%s2 + $0x38] sm:$0xff]
    %144 = vset.pattern.permute.xlu0 0
    %145 = vperm.xlu0 %144, %v135
    %v146 = vpop.permute.xlu0 %145
    %149 = vset.pattern.permute.xlu0 0
    %150 = vperm.xlu0 %149, %v136
    %v151 = vpop.permute.xlu0 %150
    %154 = vset.pattern.permute.xlu0 0
    %155 = vperm.xlu0 %154, %v137
    %v156 = vpop.permute.xlu0 %155
    %159 = vset.pattern.permute.xlu0 0
    %160 = vperm.xlu0 %159, %v138
    %v161 = vpop.permute.xlu0 %160
    %164 = vset.pattern.permute.xlu0 0
    %165 = vperm.xlu0 %164, %v139
    %v166 = vpop.permute.xlu0 %165
    %169 = vset.pattern.permute.xlu0 0
    %170 = vperm.xlu0 %169, %v140
    %v171 = vpop.permute.xlu0 %170
    %174 = vset.pattern.permute.xlu0 0
    %175 = vperm.xlu0 %174, %v141
    %v176 = vpop.permute.xlu0 %175
    %179 = vset.pattern.permute.xlu0 0
    %180 = vperm.xlu0 %179, %v142
    %v181 = vpop.permute.xlu0 %180
    %v183 = vadd.f32 %v127, %v146
    %v184 = vadd.f32 %v128, %v151
    %v185 = vadd.f32 %v129, %v156
    %v186 = vadd.f32 %v130, %v161
    %v187 = vadd.f32 %v131, %v166
    %v188 = vadd.f32 %v132, %v171
    %v189 = vadd.f32 %v133, %v176
    %v190 = vadd.f32 %v134, %v181
    %v191 = vmax.f32 %v183, 0.0
    %v192 = vmax.f32 %v184, 0.0
    %v193 = vmax.f32 %v185, 0.0
    %v194 = vmax.f32 %v186, 0.0
    %v195 = vmax.f32 %v187, 0.0
    %v196 = vmax.f32 %v188, 0.0
    %v197 = vmax.f32 %v189, 0.0
    %v198 = vmax.f32 %v190, 0.0
    %v199 = vld [vmem:[%s3] sm:$0xff]
    %v200 = vld [vmem:[%s3 + $0x8] sm:$0xff]
    %v201 = vld [vmem:[%s3 + $0x10] sm:$0xff]
    %v202 = vld [vmem:[%s3 + $0x18] sm:$0xff]
    %v203 = vld [vmem:[%s3 + $0x20] sm:$0xff]
    %v204 = vld [vmem:[%s3 + $0x28] sm:$0xff]
    %v205 = vld [vmem:[%s3 + $0x30] sm:$0xff]
    %v206 = vld [vmem:[%s3 + $0x38] sm:$0xff]
    %v207 = vld [vmem:[%s4] sm:$0xff]
    %v208 = vld [vmem:[%s4 + $0x8] sm:$0xff]
    %v209 = vld [vmem:[%s4 + $0x10] sm:$0xff]
    %v210 = vld [vmem:[%s4 + $0x18] sm:$0xff]
    %v211 = vld [vmem:[%s4 + $0x20] sm:$0xff]
    %v212 = vld [vmem:[%s4 + $0x28] sm:$0xff]
    %v213 = vld [vmem:[%s4 + $0x30] sm:$0xff]
    %v214 = vld [vmem:[%s4 + $0x38] sm:$0xff]
    %216 = vset.pattern.permute.xlu0 0
    %217 = vperm.xlu0 %216, %v207
    %v218 = vpop.permute.xlu0 %217
    %221 = vset.pattern.permute.xlu0 0
    %222 = vperm.xlu0 %221, %v208
    %v223 = vpop.permute.xlu0 %222
    %226 = vset.pattern.permute.xlu0 0
    %227 = vperm.xlu0 %226, %v209
    %v228 = vpop.permute.xlu0 %227
    %231 = vset.pattern.permute.xlu0 0
    %232 = vperm.xlu0 %231, %v210
    %v233 = vpop.permute.xlu0 %232
    %236 = vset.pattern.permute.xlu0 0
    %237 = vperm.xlu0 %236, %v211
    %v238 = vpop.permute.xlu0 %237
    %241 = vset.pattern.permute.xlu0 0
    %242 = vperm.xlu0 %241, %v212
    %v243 = vpop.permute.xlu0 %242
    %246 = vset.pattern.permute.xlu0 0
    %247 = vperm.xlu0 %246, %v213
    %v248 = vpop.permute.xlu0 %247
    %251 = vset.pattern.permute.xlu0 0
    %252 = vperm.xlu0 %251, %v214
    %v253 = vpop.permute.xlu0 %252
    %vm255 = vcmask 523264
    %v257 = vsel %vm255, %v199, 0
    %v260 = vsel %vm255, %v200, 0
    %v263 = vsel %vm255, %v201, 0
    %v266 = vsel %vm255, %v202, 0
    %v269 = vsel %vm255, %v203, 0
    %v272 = vsel %vm255, %v204, 0
    %v275 = vsel %vm255, %v205, 0
    %v278 = vsel %vm255, %v206, 0
    %280 = vmatpush.msra.mxu0 0.0
    %281 = vmatpush.msra.mxu0 0.0
    %282 = vmatpush.msra.mxu0 0.0
    %283 = vmatpush.msra.mxu0 0.0
    %284 = vmatpush.msra.mxu0 0.0
    %285 = vmatpush.msra.mxu0 0.0
    %286 = vmatpush.msra.mxu0 0.0
    %287 = vmatpush.msra.mxu0 0.0
    %288 = vmatpush.msra.mxu0 %v198
    %289 = vmatpush.msra.mxu0 %v197
    %290 = vmatpush.msra.mxu0 %v196
    %291 = vmatpush.msra.mxu0 %v195
    %292 = vmatpush.msra.mxu0 %v194
    %293 = vmatpush.msra.mxu0 %v193
    %294 = vmatpush.msra.mxu0 %v192
    %295 = vmatpush.msra.mxu0 %v191
    %296 = vmatmul.f32.gmra.mxu0 %v257
    %v297 = vpop.f32.mrf.mxu0
    %v298 = vadd.f32 %v218, %v297
    %299 = vmatmul.f32.gmra.mxu0 %v260
    %v300 = vpop.f32.mrf.mxu0
    %v301 = vadd.f32 %v223, %v300
    %302 = vmatmul.f32.gmra.mxu0 %v263
    %v303 = vpop.f32.mrf.mxu0
    %v304 = vadd.f32 %v228, %v303
    %305 = vmatmul.f32.gmra.mxu0 %v266
    %v306 = vpop.f32.mrf.mxu0
    %v307 = vadd.f32 %v233, %v306
    %308 = vmatmul.f32.gmra.mxu0 %v269
    %v309 = vpop.f32.mrf.mxu0
    %v310 = vadd.f32 %v238, %v309
    %311 = vmatmul.f32.gmra.mxu0 %v272
    %v312 = vpop.f32.mrf.mxu0
    %v313 = vadd.f32 %v243, %v312
    %314 = vmatmul.f32.gmra.mxu0 %v275
    %v315 = vpop.f32.mrf.mxu0
    %v316 = vadd.f32 %v248, %v315
    %317 = vmatmul.f32.gmra.mxu0 %v278
    %v318 = vpop.f32.mrf.mxu0
    %v319 = vadd.f32 %v253, %v318
    %320 = vdwg.mxu0
    %v321 = vmax.f32 %v298, 0.0
    %v322 = vmax.f32 %v301, 0.0
    %v323 = vmax.f32 %v304, 0.0
    %v324 = vmax.f32 %v307, 0.0
    %v325 = vmax.f32 %v310, 0.0
    %v326 = vmax.f32 %v313, 0.0
    %v327 = vmax.f32 %v316, 0.0
    %v328 = vmax.f32 %v319, 0.0
    %v329 = vld [vmem:[%s5] sm:$0xff]
    %v330 = vld [vmem:[%s5 + $0x8] sm:$0xff]
    %v331 = vld [vmem:[%s5 + $0x10] sm:$0xff]
    %v332 = vld [vmem:[%s5 + $0x18] sm:$0xff]
    %v333 = vld [vmem:[%s5 + $0x20] sm:$0xff]
    %v334 = vld [vmem:[%s5 + $0x28] sm:$0xff]
    %v335 = vld [vmem:[%s5 + $0x30] sm:$0xff]
    %v336 = vld [vmem:[%s5 + $0x38] sm:$0xff]
    %338 = vset.pattern.permute.xlu0 0
    %339 = vperm.xlu0 %338, %v329
    %v340 = vpop.permute.xlu0 %339
    %343 = vset.pattern.permute.xlu0 0
    %344 = vperm.xlu0 %343, %v330
    %v345 = vpop.permute.xlu0 %344
    %348 = vset.pattern.permute.xlu0 0
    %349 = vperm.xlu0 %348, %v331
    %v350 = vpop.permute.xlu0 %349
    %353 = vset.pattern.permute.xlu0 0
    %354 = vperm.xlu0 %353, %v332
    %v355 = vpop.permute.xlu0 %354
    %358 = vset.pattern.permute.xlu0 0
    %359 = vperm.xlu0 %358, %v333
    %v360 = vpop.permute.xlu0 %359
    %363 = vset.pattern.permute.xlu0 0
    %364 = vperm.xlu0 %363, %v334
    %v365 = vpop.permute.xlu0 %364
    %368 = vset.pattern.permute.xlu0 0
    %369 = vperm.xlu0 %368, %v335
    %v370 = vpop.permute.xlu0 %369
    %373 = vset.pattern.permute.xlu0 0
    %374 = vperm.xlu0 %373, %v336
    %v375 = vpop.permute.xlu0 %374
    %v377 = vmul.f32 %v321, %v340
    %v378 = vmul.f32 %v322, %v345
    %v379 = vmul.f32 %v323, %v350
    %v380 = vmul.f32 %v324, %v355
    %v381 = vmul.f32 %v325, %v360
    %v382 = vmul.f32 %v326, %v365
    %v383 = vmul.f32 %v327, %v370
    %v384 = vmul.f32 %v328, %v375
    %v385 = vadd.f32 %v377, %v378
    %v386 = vadd.f32 %v385, %v379
    %v387 = vadd.f32 %v386, %v380
    %v388 = vadd.f32 %v387, %v381
    %v389 = vadd.f32 %v388, %v382
    %v390 = vadd.f32 %v389, %v383
    %v391 = vadd.f32 %v390, %v384
    %v392 = vrot.slane %v391, 4
    %v393 = vadd.f32 %v391, %v392
    %v394 = vrot.slane %v393, 2
    %v395 = vadd.f32 %v393, %v394
    %v396 = vrot.slane %v395, 1
    %v397 = vadd.f32 %v395, %v396
    %s398 = sld [smem:[#allocation2]]
    %v399 = vstv %s398
    %v400 = vadd.f32 %v397, %v399
    %401 = vst [vmem:[#allocation3] sm:$0x1] %v400
    // Predicated region
    $region30: #{tpu_custom_call.1} parent=1 // pred_check
      _
    $region31: #{tpu_custom_call.1} parent=1 // pred_check_branch
      %403 = sbr.rel (0) target = $region33
    $region32: #{tpu_custom_call.1} parent=1 // pred_region
      %405 = vsyncadd [#allocation4], 0
      %s407 = sshll.u32 [#allocation3], 4
      %s408 = int_to_ptr.vmem [resolvable:$true] %s407
      %s409 = sshll.u32 %s7, 4
      %s410 = int_to_ptr.hbm [resolvable:$true] %s409
      %412 = dma.vmem_to_hbm [thread:$0]  %s408, 16, %s410, [#allocation4]
    $region33: #{tpu_custom_call.1} parent=1 // pred_fallthru
      _
    // Predicated region
    $region34: #{tpu_custom_call.1} parent=1 // pred_check
      _
    $region35: #{tpu_custom_call.1} parent=1 // pred_check_branch
      %414 = sbr.rel (0) target = $region37
    $region36: #{tpu_custom_call.1} parent=1 // pred_region
      %416 = dma.done [#allocation4], 16
    $region37: #{tpu_custom_call.1} parent=1 // pred_fallthru
      _
    %417 = vsyncpa [#allocation4], 1

</llo_original>
